<compile_context>
chip_gen: v5e
topology: v5e:2x2
jax: 0.10.0
libtpu: 0.0.40
codegen_flags: <defaults>
</compile_context>

<pallas_src>
import functools

import jax
import jax.numpy as jnp
from jax import lax
from jax.experimental import pallas as pl
from jax.experimental.pallas import tpu as pltpu


def _round_up(v, m):
    return ((v + m - 1) // m) * m


def _sublane(itemsize):
    # Sublane packing of the dtype: f32 -> 8, bf16 -> 16, int8/fp8 -> 32.
    return max(8, 32 // max(1, itemsize))


def _vmem_budget():
    """Returns (tile_budget_bytes, vmem_limit_bytes), generation aware."""
    cap = 64 * 1024 * 1024  # conservative fallback (v7x per-TC VMEM)
    try:
        info = pltpu.get_tpu_info()
        cap = int(getattr(info, "vmem_capacity_bytes", cap)) or cap
    except Exception:
        pass
    tile_budget = int(cap * 0.45)  # target for the double-buffered DMA tiles
    vmem_limit = max(32 * 1024 * 1024,
                     min(int(cap * 0.70), 112 * 1024 * 1024))
    return tile_budget, vmem_limit


# --------------------------------------------------------------------------
# Primary kernel: whole H*W plane per block, row-tiled only.
# --------------------------------------------------------------------------
def _pool_kernel(x_ref, out_ref, *, inv_hw):
    # x_ref: (TILE_ROWS, H*W) in VMEM, native dtype.
    x = x_ref[...]
    # Max pool: exact in the input dtype.
    mx = jnp.max(x, axis=-1, keepdims=True).astype(out_ref.dtype)
    # Avg pool: accumulate the sum in f32, scale once, downcast.
    s = jnp.sum(x, axis=-1, keepdims=True, dtype=jnp.float32)
    av = (s * inv_hw).astype(out_ref.dtype)
    # Single merged output block: col 0 = max, col 1 = avg.
    out_ref[...] = jnp.concatenate([mx, av], axis=-1)


# --------------------------------------------------------------------------
# Fallback kernel: H*W axis split across a second ("arbitrary") grid dim with
# running max/sum scratch.  Used when a full plane does not fit the budget.
# --------------------------------------------------------------------------
def _pool_kernel_hw_split(x_ref, out_ref, max_sc, sum_sc, *, hw, tile_hw, inv_hw):
    k = pl.program_id(1)

    @pl.when(k == 0)
    def _():
        max_sc[...] = jnp.full_like(max_sc, -jnp.inf)
        sum_sc[...] = jnp.zeros_like(sum_sc)

    x = x_ref[...].astype(jnp.float32)
    if hw % tile_hw != 0:
        # Ragged last H*W block: mask out-of-range lanes so padding garbage
        # never enters the running max/sum.
        col = k * tile_hw + lax.broadcasted_iota(jnp.int32, x.shape, 1)
        valid = col < hw
        xm = jnp.where(valid, x, -jnp.inf)
        xs = jnp.where(valid, x, 0.0)
    else:
        xm = x
        xs = x

    max_sc[...] = jnp.maximum(max_sc[...], jnp.max(xm, axis=-1, keepdims=True))
    sum_sc[...] = sum_sc[...] + jnp.sum(xs, axis=-1, keepdims=True)

    @pl.when(k == pl.num_programs(1) - 1)
    def _():
        out_ref[...] = jnp.concatenate(
            [max_sc[...], sum_sc[...] * inv_hw], axis=-1).astype(out_ref.dtype)


# --------------------------------------------------------------------------
# Tiling policy
# --------------------------------------------------------------------------
def _choose_tile_rows(rows, hw_pad, itemsize, subl, budget):
    """Largest sublane-aligned row tile under the budget, with >= ~8 blocks."""
    # Double-buffered: input tile (hw_pad lanes) + (T, 2) output block whose
    # 2-wide column lane-pads to 128.
    per_row = 2 * itemsize * hw_pad + 2 * itemsize * 128
    t = max(subl, budget // per_row)
    # Keep at least ~8 row blocks when rows allow, so the "parallel" axis
    # actually shards across v7x's two TensorCores and the pipeline overlaps.
    min_blocks = 8
    cap = max(subl, ((rows // min_blocks) // subl) * subl)
    t = min(t, cap)
    t = max(subl, (t // subl) * subl)
    if t >= rows:
        return rows  # single full-extent block (allowed even if rows % 8 != 0)
    return t


def _choose_split_tiles(rows, hw, itemsize, subl, budget):
    """(tile_rows, tile_hw) for the H*W-split fallback path."""
    tile_rows = rows if rows <= 512 else 512
    if tile_rows != rows:
        tile_rows = max(subl, (tile_rows // subl) * subl)

    def hw_tile(tr):
        return (budget // (2 * itemsize * max(1, tr))) // 128 * 128

    tile_hw = hw_tile(tile_rows)
    while tile_hw < 128 and tile_rows > subl:
        tile_rows = max(subl, ((tile_rows // 2) // subl) * subl)
        tile_hw = hw_tile(tile_rows)
    tile_hw = max(128, tile_hw)
    if tile_hw >= hw:
        tile_hw = hw  # single column block; full-extent is always legal
    return tile_rows, tile_hw


# --------------------------------------------------------------------------
# Wrapper
# --------------------------------------------------------------------------
def adaptive_concat_pool2d(x, *, force_hw_split=False):
    """x: (N, C, H, W) -> (N, 2*C, 1, 1), matching AdaptiveConcatPool2d((1,1))."""
    n, c, h, w = x.shape
    rows, hw = n * c, h * w
    itemsize = jnp.dtype(x.dtype).itemsize
    subl = _sublane(itemsize)
    hw_pad = _round_up(hw, 128)
    tile_budget, vmem_limit = _vmem_budget()

    xf = x.reshape(rows, hw)  # free reshape in NCHW layout
    inv_hw = 1.0 / float(hw)

    compiler_params = pltpu.CompilerParams(
        dimension_semantics=None,  # filled per path below
        vmem_limit_bytes=vmem_limit,
    )
    cost = pl.CostEstimate(
        flops=2 * rows * hw,
        transcendentals=0,
        bytes_accessed=rows * hw * itemsize + 2 * rows * itemsize,
    )

    # Minimum double-buffered footprint of a subl-row tile over the full plane.
    min_footprint = 2 * itemsize * subl * hw_pad + 2 * itemsize * subl * 128
    use_split = force_hw_split or (min_footprint > tile_budget)

    if not use_split:
        tile_rows = _choose_tile_rows(rows, hw_pad, itemsize, subl, tile_budget)
        grid = (pl.cdiv(rows, tile_rows),)
        # NOTE: a ragged last row-block reads OOB input rows (garbage), but
        # those rows' results map to OOB output rows which Pallas masks on
        # writeback; the reduction axis is fully covered per block, so this
        # is benign.
        pooled = pl.pallas_call(
            functools.partial(_pool_kernel, inv_hw=inv_hw),
            out_shape=jax.ShapeDtypeStruct((rows, 2), x.dtype),
            grid_spec=pltpu.PrefetchScalarGridSpec(
                num_scalar_prefetch=0,
                grid=grid,
                in_specs=[pl.BlockSpec((tile_rows, hw), lambda i: (i, 0))],
                out_specs=pl.BlockSpec((tile_rows, 2), lambda i: (i, 0)),
            ),
            compiler_params=pltpu.CompilerParams(
                dimension_semantics=("parallel",),
                vmem_limit_bytes=vmem_limit,
            ),
            cost_estimate=cost,
        )(xf)
    else:
        tile_rows, tile_hw = _choose_split_tiles(rows, hw, itemsize, subl,
                                                 tile_budget)
        if force_hw_split:
            tile_hw = min(hw, 128)  # small tiles only for testing this path
        grid = (pl.cdiv(rows, tile_rows), pl.cdiv(hw, tile_hw))
        pooled = pl.pallas_call(
            functools.partial(_pool_kernel_hw_split,
                              hw=hw, tile_hw=tile_hw, inv_hw=inv_hw),
            out_shape=jax.ShapeDtypeStruct((rows, 2), x.dtype),
            grid_spec=pltpu.PrefetchScalarGridSpec(
                num_scalar_prefetch=0,
                grid=grid,
                in_specs=[pl.BlockSpec((tile_rows, tile_hw),
                                       lambda i, k: (i, k))],
                out_specs=pl.BlockSpec((tile_rows, 2), lambda i, k: (i, 0)),
                scratch_shapes=[
                    pltpu.VMEM((tile_rows, 1), jnp.float32),  # running max
                    pltpu.VMEM((tile_rows, 1), jnp.float32),  # running sum
                ],
            ),
            compiler_params=pltpu.CompilerParams(
                dimension_semantics=("parallel", "arbitrary"),
                vmem_limit_bytes=vmem_limit,
            ),
            cost_estimate=cost,
        )(xf)

    # Glue (tiny): split columns, channel-concat [max, avg], restore 1x1 dims.
    pooled = pooled.reshape(n, c, 2)
    mx = pooled[:, :, 0]
    av = pooled[:, :, 1]
    return jnp.concatenate([mx, av], axis=1).reshape(n, 2 * c, 1, 1)


if __name__ == "__main__":
    key = jax.random.PRNGKey(0)

    def ref_pool(v):
        return jnp.concatenate(
            [jnp.max(v, axis=(2, 3), keepdims=True),
             jnp.mean(v, axis=(2, 3), keepdims=True)],
            axis=1,
        )

    # Primary (whole-plane) path.
    x = jax.random.normal(key, (2, 4, 16, 16), dtype=jnp.float32)
    out = adaptive_concat_pool2d(x)
    jax.block_until_ready(out)
    assert out.shape == (2, 8, 1, 1), out.shape
    assert jnp.allclose(out, ref_pool(x), atol=1e-5, rtol=1e-5)

    # H*W-split fallback path, including the ragged (hw % tile_hw != 0) mask.
    x2 = jax.random.normal(jax.random.PRNGKey(0), (2, 3, 10, 15),
                           dtype=jnp.float32)
    out2 = adaptive_concat_pool2d(x2, force_hw_split=True)
    jax.block_until_ready(out2)
    assert out2.shape == (2, 6, 1, 1), out2.shape
    assert jnp.allclose(out2, ref_pool(x2), atol=1e-5, rtol=1e-5)

    print("KERNEL_OK")
</pallas_src>

<mosaic_0001>
module attributes {stable_mosaic.version = 11 : i64} {
  func.func @_pool_kernel(%arg0: i32, %arg1: memref<8x256xf32, #tpu.memory_space<vmem>>, %arg2: memref<8x2xf32, #tpu.memory_space<vmem>>) attributes {dimension_semantics = [#tpu.dimension_semantics<parallel>], iteration_bounds = array<i64: 1>, scalar_prefetch = 0 : i64, scratch_operands = 0 : i64, tpu.core_type = #tpu.core_type<tc>, window_params = [{transform_indices = @transform_0, window_bounds = array<i64: 8, 256>}, {transform_indices = @transform_1, window_bounds = array<i64: 8, 2>}]} {
    %c0 = arith.constant 0 : index
    %c0_0 = arith.constant 0 : index
    %0 = vector.load %arg1[%c0, %c0_0] : memref<8x256xf32, #tpu.memory_space<vmem>>, vector<8x256xf32>
    %cst = arith.constant dense<0xFF800000> : vector<8xf32>
    %1 = vector.multi_reduction <maximumf>, %0, %cst [1] : vector<8x256xf32> to vector<8xf32>
    %2 = vector.shape_cast %1 : vector<8xf32> to vector<8x1xf32>
    %cst_1 = arith.constant dense<0.000000e+00> : vector<8xf32>
    %3 = vector.multi_reduction <add>, %0, %cst_1 [1] : vector<8x256xf32> to vector<8xf32>
    %4 = vector.shape_cast %3 : vector<8xf32> to vector<8x1xf32>
    %cst_2 = arith.constant 3.906250e-03 : f32
    %5 = vector.broadcast %cst_2 : f32 to vector<8x1xf32>
    %6 = arith.mulf %4, %5 : vector<8x1xf32>
    %7 = tpu.concatenate %2, %6 in 1 : vector<8x1xf32>, vector<8x1xf32> -> vector<8x2xf32>
    %c0_3 = arith.constant 0 : index
    %c0_4 = arith.constant 0 : index
    %8 = vector.load %arg2[%c0_3, %c0_4] : memref<8x2xf32, #tpu.memory_space<vmem>>, vector<8x2xf32>
    tpu.vector_store %arg2[%c0_3, %c0_4], %7 {strides = array<i32>} : memref<8x2xf32, #tpu.memory_space<vmem>>, vector<8x2xf32>,
    return
  }
  func.func @transform_0(%arg0: i32) -> (i32, i32) {
    %c0_i32 = arith.constant 0 : i32
    %c0_i32_0 = arith.constant 0 : i32
    return %arg0, %c0_i32 : i32, i32
  }
  func.func @transform_1(%arg0: i32) -> (i32, i32) {
    %c0_i32 = arith.constant 0 : i32
    %c0_i32_0 = arith.constant 0 : i32
    return %arg0, %c0_i32 : i32, i32
  }
}

</mosaic_0001>

<llo_original>
// kernel: tpu_custom_call.1
$region0: #{tpu_custom_call.1}
  #allocation0 [shape = 'u32[]', space=smem, size = 0x4, offset = 0x4, fixed_abs, tag = 'smem constant byte address 0x4 - core index']
  #allocation1 [shape = 'u32[72,128]{1,0:T(1,128)}', space=vmem, size = 0x9000, scoped, tag = 'internal scratch']
  %s0 = inlined_call_operand.hbm [shape: f32[8,256], index: 0, kind: input, shape index: {}]
  %s1 = inlined_call_operand.vmem [shape: f32[8,2], index: 1, kind: output, shape index: {}]
  %s2 = sld [smem:[#allocation0]]
  $region18: #{tpu_custom_call.1} parent=0
    _
  %s4 = ssub.s32 1, %s2
  %s5 = scalar_select 0, %s4, %s2
  $region1: #{tpu_custom_call.1} parent=0
    #allocation2 [shape = 'u8[8192]{0}', space=vmem, size = 0x2000, scoped, tag = 'input window, operand 0, single buffered']
    #allocation3 [shape = 's32[1]{0}', space=sflag, size = 0x4, scoped, tag = 'scoped memory for tpu_custom_call.1']
    %6 = vsyncpa [#allocation3], 0
    // Predicated region
    $region2: #{tpu_custom_call.1} parent=1 // pred_check
      _
    $region3: #{tpu_custom_call.1} parent=1 // pred_check_branch
      %8 = sbr.rel (0) target = $region5
    $region4: #{tpu_custom_call.1} parent=1 // pred_region
      %10 = vsyncadd [#allocation3], 0
      %s12 = sshll.u32 %s0, 4
      %s13 = int_to_ptr.hbm [resolvable:$true] %s12
      %s14 = sshll.u32 [#allocation2], 4
      %s15 = int_to_ptr.vmem [resolvable:$true] %s14
      %17 = dma.hbm_to_vmem [thread:$0]  %s13, 256, %s15, [#allocation3]
    $region5: #{tpu_custom_call.1} parent=1 // pred_fallthru
      _
    // Predicated region
    $region6: #{tpu_custom_call.1} parent=1 // pred_check
      _
    $region7: #{tpu_custom_call.1} parent=1 // pred_check_branch
      %19 = sbr.rel (0) target = $region9
    $region8: #{tpu_custom_call.1} parent=1 // pred_region
      %21 = dma.done [#allocation3], 256
    $region9: #{tpu_custom_call.1} parent=1 // pred_fallthru
      _
    %v22 = vld [vmem:[#allocation2] sm:$0xff]
    %v23 = vld [vmem:[#allocation2 + $0x8] sm:$0xff]
    %v24 = vmax.f32 %v22, %v23
    %25 = vmax.xlane.f32.xlu0 %v24
    %v26 = vpop.xlane.xlu0 %25
    %v27 = vadd.f32 %v22, %v23
    %28 = vadd.xlane.f32.xlu0 %v27
    %v29 = vpop.xlane.xlu0 %28
    %v30 = vmul.f32 %v29, 0.00390625
    %vm31 = vcmask 7168
    %v32 = vsel %vm31, %v26, %v30
    %vm33 = vcmask 15360
    %34 = vst.msk [vmem:[%s1] sm:$0xff] %vm33, %v32
    // Predicated region
    $region10: #{tpu_custom_call.1} parent=1 // pred_check
      _
    $region11: #{tpu_custom_call.1} parent=1 // pred_check_branch
      %36 = sbr.rel (0) target = $region13
    $region12: #{tpu_custom_call.1} parent=1 // pred_region
      _
    $region13: #{tpu_custom_call.1} parent=1 // pred_fallthru
      _
    // Predicated region
    $region14: #{tpu_custom_call.1} parent=1 // pred_check
      _
    $region15: #{tpu_custom_call.1} parent=1 // pred_check_branch
      %38 = sbr.rel (0) target = $region17
    $region16: #{tpu_custom_call.1} parent=1 // pred_region
      _
    $region17: #{tpu_custom_call.1} parent=1 // pred_fallthru
      _
    %39 = vsyncpa [#allocation3], 1

</llo_original>
